<compile_context>
chip_gen: v6e
topology: v6e:2x2x1
jax: 0.10.0
libtpu: 0.0.40
codegen_flags: <defaults>
</compile_context>

<pallas_src>
import functools
import math

import jax
import jax.numpy as jnp
from jax.experimental import pallas as pl
from jax.experimental.pallas import tpu as pltpu

BN_EPS = 1e-5
LANE = 128


def _round_up(x, m):
    return ((x + m - 1) // m) * m


def _classifier_kernel(nd,
                       cls_ref, des_ref, inv_ref,
                       gi_ref, bi_ref, gf_ref, bf_ref, gg_ref, bg_ref,
                       w_ref,
                       ita_ref, iti_ref, featf_ref, feat_ref, logits_ref):
    i = pl.program_id(0)

    @pl.when(i == 0)
    def _init():
        logits_ref[...] = jnp.zeros_like(logits_ref)

    @pl.when(i < nd)
    def _bn_and_head():
        x = cls_ref[...]                                    # (B, TD) f32 CLS tile

        # bn_i / bn_f share the batch statistics of x (training mode, biased var).
        mu = jnp.mean(x, axis=0, keepdims=True)
        xc = x - mu
        var = jnp.mean(xc * xc, axis=0, keepdims=True)
        xn = xc * jax.lax.rsqrt(var + BN_EPS)
        xi = xn * gi_ref[...] + bi_ref[...]                 # bn_i(cls)
        xf = xn * gf_ref[...] + bf_ref[...]                 # bn_f(cls)

        # bn_g over xf needs its own statistics.
        mu_g = jnp.mean(xf, axis=0, keepdims=True)
        xgc = xf - mu_g
        var_g = jnp.mean(xgc * xgc, axis=0, keepdims=True)
        xg = xgc * jax.lax.rsqrt(var_g + BN_EPS) * gg_ref[...] + bg_ref[...]

        ita_ref[...] = x                                    # first half of feat_ita
        iti_ref[...] = xi                                   # first half of feat_iti
        featf_ref[...] = xf
        feat_ref[...] = xg

        # Head matmul partial product on the MXU (bf16 operands, f32 accumulation
        # directly into the resident logits output block).
        logits_ref[...] += jnp.dot(xg.astype(jnp.bfloat16), w_ref[...],
                                   preferred_element_type=jnp.float32)

    @pl.when(i >= nd)
    def _concat_tail():
        ita_ref[...] = des_ref[...]                         # second half of feat_ita
        iti_ref[...] = inv_ref[...]                         # second half of feat_iti


def transformer_classifier_forward(features, word_embed_des, word_embed_inv, params):
    """features: (B, N, D) f32 ViT tokens; word_embed_*: (B, Dt) f32 text embeddings."""
    B, N, D = features.shape
    Dt = word_embed_des.shape[1]
    C = params["head_w"].shape[0]
    w_t = params["head_w_t"]                    # (D, C_pad) bf16, pre-transposed/padded
    C_pad = w_t.shape[1]

    if D % LANE or Dt % LANE:
        raise ValueError("D and Dt must be multiples of 128 "
                         "(ViT dim 768 / CLIP text dim 512 satisfy this).")

    TD = min(512, math.gcd(D, Dt))              # lane-dense feature tile
    nd, ndt = D // TD, Dt // TD
    grid = (nd + ndt,)

    # Free row-major collapse: the CLS token is exactly the first D columns, so the
    # Pallas input pipeline fetches only the CLS tiles (no wrapper slice kernel).
    feats2d = features.reshape(B, N * D)

    d_bn = lambda i: (0, jnp.minimum(i, nd - 1))        # clamp during concat phase (no refetch)
    d_tail = lambda i: (0, jnp.maximum(i - nd, 0))      # clamp during BN phase (no refetch)

    in_specs = [
        pl.BlockSpec((B, TD), d_bn),                    # CLS D-tile (view into features)
        pl.BlockSpec((B, TD), d_tail),                  # word_embed_des tile
        pl.BlockSpec((B, TD), d_tail),                  # word_embed_inv tile
        pl.BlockSpec((1, TD), d_bn),                    # bn_i gamma
        pl.BlockSpec((1, TD), d_bn),                    # bn_i beta
        pl.BlockSpec((1, TD), d_bn),                    # bn_f gamma
        pl.BlockSpec((1, TD), d_bn),                    # bn_f beta
        pl.BlockSpec((1, TD), d_bn),                    # bn_g gamma
        pl.BlockSpec((1, TD), d_bn),                    # bn_g beta
        pl.BlockSpec((TD, C_pad), lambda i: (jnp.minimum(i, nd - 1), 0)),  # head W tile
    ]

    out_shapes = (
        jax.ShapeDtypeStruct((B, D + Dt), jnp.float32),   # feat_ita
        jax.ShapeDtypeStruct((B, D + Dt), jnp.float32),   # feat_iti
        jax.ShapeDtypeStruct((B, D), jnp.float32),        # feat_f
        jax.ShapeDtypeStruct((B, D), jnp.float32),        # feat
        jax.ShapeDtypeStruct((B, C_pad), jnp.float32),    # logits (lane-padded class dim)
    )
    out_specs = [
        pl.BlockSpec((B, TD), lambda i: (0, i)),          # cols [0,D): cls, [D,D+Dt): des
        pl.BlockSpec((B, TD), lambda i: (0, i)),          # cols [0,D): bn_i(cls), tail: inv
        pl.BlockSpec((B, TD), d_bn),                      # feat_f D-tiles
        pl.BlockSpec((B, TD), d_bn),                      # feat   D-tiles
        pl.BlockSpec((B, C_pad), lambda i: (0, 0)),       # resident logits accumulator
    ]

    feat_ita, feat_iti, feat_f, feat, logits_pad = pl.pallas_call(
        functools.partial(_classifier_kernel, nd),
        out_shape=out_shapes,
        grid_spec=pltpu.PrefetchScalarGridSpec(
            num_scalar_prefetch=0,
            grid=grid,
            in_specs=in_specs,
            out_specs=out_specs,
        ),
        compiler_params=pltpu.CompilerParams(
            # The single grid axis carries the logits accumulation -> "arbitrary".
            # TODO(synk): for v7x megacore, split the BN/copy work onto a leading
            # "parallel" axis so both TensorCores are used.
            dimension_semantics=("arbitrary",),
            vmem_limit_bytes=64 * 1024 * 1024,
        ),
    )(feats2d, word_embed_des, word_embed_inv,
      params["bn_i_gamma"], params["bn_i_beta"],
      params["bn_f_gamma"], params["bn_f_beta"],
      params["bn_g_gamma"], params["bn_g_beta"],
      w_t)

    logits_g = logits_pad[:, :C]                # drop lane padding of the class dim
    return [feat_ita, feat_iti, feat_f, feat], [logits_g]


def init_params(key, dim, num_classes):
    # _init_kaiming on BatchNorm1d -> weight=1, bias=0
    # _init_weights on head (Linear, bias=False) -> trunc_normal std=0.001
    head_w = 0.001 * jax.random.truncated_normal(
        key, -2.0, 2.0, (num_classes, dim), dtype=jnp.float32)
    # Pre-transposed, lane-padded, bf16 head weight for the MXU (done once at init,
    # not per forward call).
    c_pad = _round_up(num_classes, LANE)
    head_w_t = jnp.zeros((dim, c_pad), jnp.float32).at[:, :num_classes].set(head_w.T)
    ones = jnp.ones((1, dim), jnp.float32)
    zeros = jnp.zeros((1, dim), jnp.float32)
    return {
        "head_w": head_w,                          # canonical f32 (C, D)
        "head_w_t": head_w_t.astype(jnp.bfloat16),  # (D, C_pad) bf16 for the kernel
        "bn_i_gamma": ones, "bn_i_beta": zeros,
        "bn_f_gamma": ones, "bn_f_beta": zeros,
        "bn_g_gamma": ones, "bn_g_beta": zeros,
    }


def _reference(features, des, inv, params):
    cls = features[:, 0, :]

    def bn(v, g, b):
        mu = v.mean(axis=0, keepdims=True)
        var = ((v - mu) ** 2).mean(axis=0, keepdims=True)
        return (v - mu) / jnp.sqrt(var + BN_EPS) * g + b

    feat_ita = jnp.concatenate([cls, des], axis=1)
    feat_iti = jnp.concatenate(
        [bn(cls, params["bn_i_gamma"], params["bn_i_beta"]), inv], axis=1)
    feat_f = bn(cls, params["bn_f_gamma"], params["bn_f_beta"])
    feat = bn(feat_f, params["bn_g_gamma"], params["bn_g_beta"])
    logits = feat @ params["head_w"].T
    return [feat_ita, feat_iti, feat_f, feat], [logits]


if __name__ == "__main__":
    B, N, D = 8, 8, 256         # batch, ViT tokens, dim (multiple of 128; 768 in prod)
    Dt = 128                    # text-embedding dim (multiple of 128; 512 in prod)
    num_classes = 16

    key = jax.random.PRNGKey(0)
    k_feat, k_des, k_inv, k_param, k_g1, k_g2, k_g3 = jax.random.split(key, 7)

    features = jax.random.normal(k_feat, (B, N, D), dtype=jnp.float32)
    word_embed_des = jax.random.normal(k_des, (B, Dt), dtype=jnp.float32)
    word_embed_inv = jax.random.normal(k_inv, (B, Dt), dtype=jnp.float32)

    params = init_params(k_param, D, num_classes)
    # Perturb the BN scales so the affine paths are actually exercised (module init
    # is gamma=1/beta=0, but gamma trains away from 1).
    params["bn_i_gamma"] = params["bn_i_gamma"] + 0.1 * jax.random.normal(k_g1, (1, D), jnp.float32)
    params["bn_f_gamma"] = params["bn_f_gamma"] + 0.1 * jax.random.normal(k_g2, (1, D), jnp.float32)
    params["bn_g_gamma"] = params["bn_g_gamma"] + 0.1 * jax.random.normal(k_g3, (1, D), jnp.float32)

    fwd = jax.jit(transformer_classifier_forward)
    feats_out, logits_out = fwd(features, word_embed_des, word_embed_inv, params)
    jax.block_until_ready(feats_out)
    jax.block_until_ready(logits_out)

    # Correctness check against a pure-JAX f32 reference.
    ref_feats, ref_logits = _reference(features, word_embed_des, word_embed_inv, params)
    names = ["feat_ita", "feat_iti", "feat_f", "feat"]
    for name, a, b in zip(names, feats_out, ref_feats):
        assert jnp.allclose(a, b, atol=1e-4, rtol=1e-4), f"{name} mismatch vs reference"
    # Head matmul runs in bf16 on the MXU -> slightly looser tolerance for logits.
    assert jnp.allclose(logits_out[0], ref_logits[0], atol=2e-3, rtol=2e-2), \
        "logits mismatch vs reference"

    # TODO(synk): ViT_model.encode_image / clip.tokenize / ViT_model.encode_text are
    # external pretrained models; their outputs are supplied as kernel inputs.
    # TODO(synk): BatchNorm1d running_mean/running_var updates (a training-time side
    # effect) are not emulated; only the normalization path of the forward is computed.
    print("KERNEL_OK")
</pallas_src>

<mosaic_0001>
module attributes {stable_mosaic.version = 11 : i64} {
  func.func @_classifier_kernel(%arg0: i32, %arg1: memref<8x128xf32, #tpu.memory_space<vmem>>, %arg2: memref<8x128xf32, #tpu.memory_space<vmem>>, %arg3: memref<8x128xf32, #tpu.memory_space<vmem>>, %arg4: memref<1x128xf32, #tpu.memory_space<vmem>>, %arg5: memref<1x128xf32, #tpu.memory_space<vmem>>, %arg6: memref<1x128xf32, #tpu.memory_space<vmem>>, %arg7: memref<1x128xf32, #tpu.memory_space<vmem>>, %arg8: memref<1x128xf32, #tpu.memory_space<vmem>>, %arg9: memref<1x128xf32, #tpu.memory_space<vmem>>, %arg10: memref<128x128xbf16, #tpu.memory_space<vmem>>, %arg11: memref<8x128xf32, #tpu.memory_space<vmem>>, %arg12: memref<8x128xf32, #tpu.memory_space<vmem>>, %arg13: memref<8x128xf32, #tpu.memory_space<vmem>>, %arg14: memref<8x128xf32, #tpu.memory_space<vmem>>, %arg15: memref<8x128xf32, #tpu.memory_space<vmem>>) attributes {dimension_semantics = [#tpu.dimension_semantics<arbitrary>], iteration_bounds = array<i64: 3>, scalar_prefetch = 0 : i64, scratch_operands = 0 : i64, tpu.core_type = #tpu.core_type<tc>, window_params = [{transform_indices = @transform_0, window_bounds = array<i64: 8, 128>}, {transform_indices = @transform_1, window_bounds = array<i64: 8, 128>}, {transform_indices = @transform_2, window_bounds = array<i64: 8, 128>}, {transform_indices = @transform_3, window_bounds = array<i64: 1, 128>}, {transform_indices = @transform_4, window_bounds = array<i64: 1, 128>}, {transform_indices = @transform_5, window_bounds = array<i64: 1, 128>}, {transform_indices = @transform_6, window_bounds = array<i64: 1, 128>}, {transform_indices = @transform_7, window_bounds = array<i64: 1, 128>}, {transform_indices = @transform_8, window_bounds = array<i64: 1, 128>}, {transform_indices = @transform_9, window_bounds = array<i64: 128, 128>}, {transform_indices = @transform_10, window_bounds = array<i64: 8, 128>}, {transform_indices = @transform_11, window_bounds = array<i64: 8, 128>}, {transform_indices = @transform_12, window_bounds = array<i64: 8, 128>}, {transform_indices = @transform_13, window_bounds = array<i64: 8, 128>}, {pipeline_mode = #tpu.pipeline_mode<synchronous>, transform_indices = @transform_14, window_bounds = array<i64: 8, 128>}]} {
    %c0_i32 = arith.constant 0 : i32
    %0 = arith.cmpi eq, %arg0, %c0_i32 : i32
    %1 = arith.extui %0 : i1 to i32
    %c0_i32_0 = arith.constant 0 : i32
    %2 = arith.cmpi ne, %1, %c0_i32_0 : i32
    scf.if %2 {
      %cst = arith.constant 0.000000e+00 : f32
      %9 = vector.broadcast %cst : f32 to vector<8x128xf32>
      %c0 = arith.constant 0 : index
      %c0_4 = arith.constant 0 : index
      %10 = vector.load %arg15[%c0, %c0_4] : memref<8x128xf32, #tpu.memory_space<vmem>>, vector<8x128xf32>
      tpu.vector_store %arg15[%c0, %c0_4], %9 {strides = array<i32>} : memref<8x128xf32, #tpu.memory_space<vmem>>, vector<8x128xf32>,
    } else {
    }
    %c2_i32 = arith.constant 2 : i32
    %3 = arith.cmpi slt, %arg0, %c2_i32 : i32
    %4 = arith.extui %3 : i1 to i32
    %c0_i32_1 = arith.constant 0 : i32
    %5 = arith.cmpi ne, %4, %c0_i32_1 : i32
    scf.if %5 {
      %c0 = arith.constant 0 : index
      %c0_4 = arith.constant 0 : index
      %9 = vector.load %arg1[%c0, %c0_4] : memref<8x128xf32, #tpu.memory_space<vmem>>, vector<8x128xf32>
      %cst = arith.constant dense<0.000000e+00> : vector<128xf32>
      %10 = vector.multi_reduction <add>, %9, %cst [0] : vector<8x128xf32> to vector<128xf32>
      %11 = vector.shape_cast %10 : vector<128xf32> to vector<1x128xf32>
      %cst_5 = arith.constant 8.000000e+00 : f32
      %12 = vector.broadcast %cst_5 : f32 to vector<1x128xf32>
      %13 = arith.divf %11, %12 : vector<1x128xf32>
      %14 = vector.broadcast %13 : vector<1x128xf32> to vector<8x128xf32>
      %15 = arith.subf %9, %14 : vector<8x128xf32>
      %16 = arith.mulf %15, %15 : vector<8x128xf32>
      %cst_6 = arith.constant dense<0.000000e+00> : vector<128xf32>
      %17 = vector.multi_reduction <add>, %16, %cst_6 [0] : vector<8x128xf32> to vector<128xf32>
      %18 = vector.shape_cast %17 : vector<128xf32> to vector<1x128xf32>
      %cst_7 = arith.constant 8.000000e+00 : f32
      %19 = vector.broadcast %cst_7 : f32 to vector<1x128xf32>
      %20 = arith.divf %18, %19 : vector<1x128xf32>
      %cst_8 = arith.constant 9.99999974E-6 : f32
      %21 = vector.broadcast %cst_8 : f32 to vector<1x128xf32>
      %22 = arith.addf %20, %21 : vector<1x128xf32>
      %23 = math.rsqrt %22 : vector<1x128xf32>
      %24 = vector.broadcast %23 : vector<1x128xf32> to vector<8x128xf32>
      %25 = arith.mulf %15, %24 : vector<8x128xf32>
      %c0_9 = arith.constant 0 : index
      %c0_10 = arith.constant 0 : index
      %26 = vector.load %arg4[%c0_9, %c0_10] : memref<1x128xf32, #tpu.memory_space<vmem>>, vector<1x128xf32>
      %27 = vector.broadcast %26 : vector<1x128xf32> to vector<8x128xf32>
      %28 = arith.mulf %25, %27 : vector<8x128xf32>
      %c0_11 = arith.constant 0 : index
      %c0_12 = arith.constant 0 : index
      %29 = vector.load %arg5[%c0_11, %c0_12] : memref<1x128xf32, #tpu.memory_space<vmem>>, vector<1x128xf32>
      %30 = vector.broadcast %29 : vector<1x128xf32> to vector<8x128xf32>
      %31 = arith.addf %28, %30 : vector<8x128xf32>
      %c0_13 = arith.constant 0 : index
      %c0_14 = arith.constant 0 : index
      %32 = vector.load %arg6[%c0_13, %c0_14] : memref<1x128xf32, #tpu.memory_space<vmem>>, vector<1x128xf32>
      %33 = vector.broadcast %32 : vector<1x128xf32> to vector<8x128xf32>
      %34 = arith.mulf %25, %33 : vector<8x128xf32>
      %c0_15 = arith.constant 0 : index
      %c0_16 = arith.constant 0 : index
      %35 = vector.load %arg7[%c0_15, %c0_16] : memref<1x128xf32, #tpu.memory_space<vmem>>, vector<1x128xf32>
      %36 = vector.broadcast %35 : vector<1x128xf32> to vector<8x128xf32>
      %37 = arith.addf %34, %36 : vector<8x128xf32>
      %cst_17 = arith.constant dense<0.000000e+00> : vector<128xf32>
      %38 = vector.multi_reduction <add>, %37, %cst_17 [0] : vector<8x128xf32> to vector<128xf32>
      %39 = vector.shape_cast %38 : vector<128xf32> to vector<1x128xf32>
      %cst_18 = arith.constant 8.000000e+00 : f32
      %40 = vector.broadcast %cst_18 : f32 to vector<1x128xf32>
      %41 = arith.divf %39, %40 : vector<1x128xf32>
      %42 = vector.broadcast %41 : vector<1x128xf32> to vector<8x128xf32>
      %43 = arith.subf %37, %42 : vector<8x128xf32>
      %44 = arith.mulf %43, %43 : vector<8x128xf32>
      %cst_19 = arith.constant dense<0.000000e+00> : vector<128xf32>
      %45 = vector.multi_reduction <add>, %44, %cst_19 [0] : vector<8x128xf32> to vector<128xf32>
      %46 = vector.shape_cast %45 : vector<128xf32> to vector<1x128xf32>
      %cst_20 = arith.constant 8.000000e+00 : f32
      %47 = vector.broadcast %cst_20 : f32 to vector<1x128xf32>
      %48 = arith.divf %46, %47 : vector<1x128xf32>
      %cst_21 = arith.constant 9.99999974E-6 : f32
      %49 = vector.broadcast %cst_21 : f32 to vector<1x128xf32>
      %50 = arith.addf %48, %49 : vector<1x128xf32>
      %51 = math.rsqrt %50 : vector<1x128xf32>
      %52 = vector.broadcast %51 : vector<1x128xf32> to vector<8x128xf32>
      %53 = arith.mulf %43, %52 : vector<8x128xf32>
      %c0_22 = arith.constant 0 : index
      %c0_23 = arith.constant 0 : index
      %54 = vector.load %arg8[%c0_22, %c0_23] : memref<1x128xf32, #tpu.memory_space<vmem>>, vector<1x128xf32>
      %55 = vector.broadcast %54 : vector<1x128xf32> to vector<8x128xf32>
      %56 = arith.mulf %53, %55 : vector<8x128xf32>
      %c0_24 = arith.constant 0 : index
      %c0_25 = arith.constant 0 : index
      %57 = vector.load %arg9[%c0_24, %c0_25] : memref<1x128xf32, #tpu.memory_space<vmem>>, vector<1x128xf32>
      %58 = vector.broadcast %57 : vector<1x128xf32> to vector<8x128xf32>
      %59 = arith.addf %56, %58 : vector<8x128xf32>
      %c0_26 = arith.constant 0 : index
      %c0_27 = arith.constant 0 : index
      %60 = vector.load %arg11[%c0_26, %c0_27] : memref<8x128xf32, #tpu.memory_space<vmem>>, vector<8x128xf32>
      tpu.vector_store %arg11[%c0_26, %c0_27], %9 {strides = array<i32>} : memref<8x128xf32, #tpu.memory_space<vmem>>, vector<8x128xf32>,
      %c0_28 = arith.constant 0 : index
      %c0_29 = arith.constant 0 : index
      %61 = vector.load %arg12[%c0_28, %c0_29] : memref<8x128xf32, #tpu.memory_space<vmem>>, vector<8x128xf32>
      tpu.vector_store %arg12[%c0_28, %c0_29], %31 {strides = array<i32>} : memref<8x128xf32, #tpu.memory_space<vmem>>, vector<8x128xf32>,
      %c0_30 = arith.constant 0 : index
      %c0_31 = arith.constant 0 : index
      %62 = vector.load %arg13[%c0_30, %c0_31] : memref<8x128xf32, #tpu.memory_space<vmem>>, vector<8x128xf32>
      tpu.vector_store %arg13[%c0_30, %c0_31], %37 {strides = array<i32>} : memref<8x128xf32, #tpu.memory_space<vmem>>, vector<8x128xf32>,
      %c0_32 = arith.constant 0 : index
      %c0_33 = arith.constant 0 : index
      %63 = vector.load %arg14[%c0_32, %c0_33] : memref<8x128xf32, #tpu.memory_space<vmem>>, vector<8x128xf32>
      tpu.vector_store %arg14[%c0_32, %c0_33], %59 {strides = array<i32>} : memref<8x128xf32, #tpu.memory_space<vmem>>, vector<8x128xf32>,
      %c0_34 = arith.constant 0 : index
      %c0_35 = arith.constant 0 : index
      %64 = vector.load %arg15[%c0_34, %c0_35] : memref<8x128xf32, #tpu.memory_space<vmem>>, vector<8x128xf32>
      %65 = arith.truncf %59 : vector<8x128xf32> to vector<8x128xbf16>
      %c0_36 = arith.constant 0 : index
      %c0_37 = arith.constant 0 : index
      %66 = vector.load %arg10[%c0_36, %c0_37] : memref<128x128xbf16, #tpu.memory_space<vmem>>, vector<128x128xbf16>
      %cst_38 = arith.constant dense<0.000000e+00> : vector<8x128xf32>
      %67 = tpu.matmul %65, %66, %cst_38 {dimension_numbers = #tpu.dot_dimension_numbers<[1], [0], [0], [1], [0, 0, 1, 1], [], []>} : vector<8x128xbf16>, vector<128x128xbf16>, vector<8x128xf32> -> vector<8x128xf32>
      %68 = arith.addf %64, %67 : vector<8x128xf32>
      %c0_39 = arith.constant 0 : index
      %c0_40 = arith.constant 0 : index
      %69 = vector.load %arg15[%c0_39, %c0_40] : memref<8x128xf32, #tpu.memory_space<vmem>>, vector<8x128xf32>
      tpu.vector_store %arg15[%c0_39, %c0_40], %68 {strides = array<i32>} : memref<8x128xf32, #tpu.memory_space<vmem>>, vector<8x128xf32>,
    } else {
    }
    %c2_i32_2 = arith.constant 2 : i32
    %6 = arith.cmpi sge, %arg0, %c2_i32_2 : i32
    %7 = arith.extui %6 : i1 to i32
    %c0_i32_3 = arith.constant 0 : i32
    %8 = arith.cmpi ne, %7, %c0_i32_3 : i32
    scf.if %8 {
      %c0 = arith.constant 0 : index
      %c0_4 = arith.constant 0 : index
      %9 = vector.load %arg2[%c0, %c0_4] : memref<8x128xf32, #tpu.memory_space<vmem>>, vector<8x128xf32>
      %c0_5 = arith.constant 0 : index
      %c0_6 = arith.constant 0 : index
      %10 = vector.load %arg11[%c0_5, %c0_6] : memref<8x128xf32, #tpu.memory_space<vmem>>, vector<8x128xf32>
      tpu.vector_store %arg11[%c0_5, %c0_6], %9 {strides = array<i32>} : memref<8x128xf32, #tpu.memory_space<vmem>>, vector<8x128xf32>,
      %c0_7 = arith.constant 0 : index
      %c0_8 = arith.constant 0 : index
      %11 = vector.load %arg3[%c0_7, %c0_8] : memref<8x128xf32, #tpu.memory_space<vmem>>, vector<8x128xf32>
      %c0_9 = arith.constant 0 : index
      %c0_10 = arith.constant 0 : index
      %12 = vector.load %arg12[%c0_9, %c0_10] : memref<8x128xf32, #tpu.memory_space<vmem>>, vector<8x128xf32>
      tpu.vector_store %arg12[%c0_9, %c0_10], %11 {strides = array<i32>} : memref<8x128xf32, #tpu.memory_space<vmem>>, vector<8x128xf32>,
    } else {
    }
    return
  }
  func.func @transform_0(%arg0: i32) -> (i32, i32) {
    %c1_i32 = arith.constant 1 : i32
    %0 = arith.minsi %arg0, %c1_i32 : i32
    %c0_i32 = arith.constant 0 : i32
    %c0_i32_0 = arith.constant 0 : i32
    return %c0_i32, %0 : i32, i32
  }
  func.func @transform_1(%arg0: i32) -> (i32, i32) {
    %c2_i32 = arith.constant 2 : i32
    %0 = arith.subi %arg0, %c2_i32 : i32
    %c0_i32 = arith.constant 0 : i32
    %1 = arith.maxsi %0, %c0_i32 : i32
    %c0_i32_0 = arith.constant 0 : i32
    %c0_i32_1 = arith.constant 0 : i32
    return %c0_i32_0, %1 : i32, i32
  }
  func.func @transform_2(%arg0: i32) -> (i32, i32) {
    %c2_i32 = arith.constant 2 : i32
    %0 = arith.subi %arg0, %c2_i32 : i32
    %c0_i32 = arith.constant 0 : i32
    %1 = arith.maxsi %0, %c0_i32 : i32
    %c0_i32_0 = arith.constant 0 : i32
    %c0_i32_1 = arith.constant 0 : i32
    return %c0_i32_0, %1 : i32, i32
  }
  func.func @transform_3(%arg0: i32) -> (i32, i32) {
    %c1_i32 = arith.constant 1 : i32
    %0 = arith.minsi %arg0, %c1_i32 : i32
    %c0_i32 = arith.constant 0 : i32
    %c0_i32_0 = arith.constant 0 : i32
    return %c0_i32, %0 : i32, i32
  }
  func.func @transform_4(%arg0: i32) -> (i32, i32) {
    %c1_i32 = arith.constant 1 : i32
    %0 = arith.minsi %arg0, %c1_i32 : i32
    %c0_i32 = arith.constant 0 : i32
    %c0_i32_0 = arith.constant 0 : i32
    return %c0_i32, %0 : i32, i32
  }
  func.func @transform_5(%arg0: i32) -> (i32, i32) {
    %c1_i32 = arith.constant 1 : i32
    %0 = arith.minsi %arg0, %c1_i32 : i32
    %c0_i32 = arith.constant 0 : i32
    %c0_i32_0 = arith.constant 0 : i32
    return %c0_i32, %0 : i32, i32
  }
  func.func @transform_6(%arg0: i32) -> (i32, i32) {
    %c1_i32 = arith.constant 1 : i32
    %0 = arith.minsi %arg0, %c1_i32 : i32
    %c0_i32 = arith.constant 0 : i32
    %c0_i32_0 = arith.constant 0 : i32
    return %c0_i32, %0 : i32, i32
  }
  func.func @transform_7(%arg0: i32) -> (i32, i32) {
    %c1_i32 = arith.constant 1 : i32
    %0 = arith.minsi %arg0, %c1_i32 : i32
    %c0_i32 = arith.constant 0 : i32
    %c0_i32_0 = arith.constant 0 : i32
    return %c0_i32, %0 : i32, i32
  }
  func.func @transform_8(%arg0: i32) -> (i32, i32) {
    %c1_i32 = arith.constant 1 : i32
    %0 = arith.minsi %arg0, %c1_i32 : i32
    %c0_i32 = arith.constant 0 : i32
    %c0_i32_0 = arith.constant 0 : i32
    return %c0_i32, %0 : i32, i32
  }
  func.func @transform_9(%arg0: i32) -> (i32, i32) {
    %c1_i32 = arith.constant 1 : i32
    %0 = arith.minsi %arg0, %c1_i32 : i32
    %c0_i32 = arith.constant 0 : i32
    %c0_i32_0 = arith.constant 0 : i32
    return %0, %c0_i32 : i32, i32
  }
  func.func @transform_10(%arg0: i32) -> (i32, i32) {
    %c0_i32 = arith.constant 0 : i32
    %c0_i32_0 = arith.constant 0 : i32
    return %c0_i32, %arg0 : i32, i32
  }
  func.func @transform_11(%arg0: i32) -> (i32, i32) {
    %c0_i32 = arith.constant 0 : i32
    %c0_i32_0 = arith.constant 0 : i32
    return %c0_i32, %arg0 : i32, i32
  }
  func.func @transform_12(%arg0: i32) -> (i32, i32) {
    %c1_i32 = arith.constant 1 : i32
    %0 = arith.minsi %arg0, %c1_i32 : i32
    %c0_i32 = arith.constant 0 : i32
    %c0_i32_0 = arith.constant 0 : i32
    return %c0_i32, %0 : i32, i32
  }
  func.func @transform_13(%arg0: i32) -> (i32, i32) {
    %c1_i32 = arith.constant 1 : i32
    %0 = arith.minsi %arg0, %c1_i32 : i32
    %c0_i32 = arith.constant 0 : i32
    %c0_i32_0 = arith.constant 0 : i32
    return %c0_i32, %0 : i32, i32
  }
  func.func @transform_14(%arg0: i32) -> (i32, i32) {
    %c0_i32 = arith.constant 0 : i32
    %c0_i32_0 = arith.constant 0 : i32
    %c0_i32_1 = arith.constant 0 : i32
    return %c0_i32, %c0_i32_0 : i32, i32
  }
}

</mosaic_0001>

<llo_original>
// kernel: transformer_classifier_forward.1
$region0: #{transformer_classifier_forward.1}
  #allocation0 [shape = 'u32[]', space=smem, size = 0x4, offset = 0x4, fixed_abs, tag = 'smem constant byte address 0x4 - core index']
  #allocation1 [shape = 'u32[144,128]{1,0:T(1,128)}', space=vmem, size = 0x12000, scoped, tag = 'internal scratch']
  %s0 = inlined_call_operand.vmem [shape: f32[8,2048], index: 0, kind: input, shape index: {}]
  %s1 = inlined_call_operand.vmem [shape: f32[8,128], index: 1, kind: input, shape index: {}]
  %s2 = inlined_call_operand.vmem [shape: f32[8,128], index: 2, kind: input, shape index: {}]
  %s3 = inlined_call_operand.vmem [shape: f32[1,256], index: 3, kind: input, shape index: {}]
  %s4 = inlined_call_operand.vmem [shape: f32[1,256], index: 4, kind: input, shape index: {}]
  %s5 = inlined_call_operand.vmem [shape: f32[1,256], index: 5, kind: input, shape index: {}]
  %s6 = inlined_call_operand.vmem [shape: f32[1,256], index: 6, kind: input, shape index: {}]
  %s7 = inlined_call_operand.vmem [shape: f32[1,256], index: 7, kind: input, shape index: {}]
  %s8 = inlined_call_operand.vmem [shape: f32[1,256], index: 8, kind: input, shape index: {}]
  %s9 = inlined_call_operand.vmem [shape: bf16[256,128], index: 9, kind: input, shape index: {}]
  %s10 = inlined_call_operand.hbm [shape: f32[8,384], index: 10, kind: output, shape index: {0}]
  %s11 = inlined_call_operand.hbm [shape: f32[8,384], index: 11, kind: output, shape index: {1}]
  %s12 = inlined_call_operand.hbm [shape: f32[8,256], index: 12, kind: output, shape index: {2}]
  %s13 = inlined_call_operand.hbm [shape: f32[8,256], index: 13, kind: output, shape index: {3}]
  %s14 = inlined_call_operand.hbm [shape: f32[8,128], index: 14, kind: output, shape index: {4}]
  %15 = xla_tuple %s10, %s11, %s12, %s13, %s14
  %s16 = sld [smem:[#allocation0]]
  $region117: #{transformer_classifier_forward.1} parent=0
    _
  %s18 = ssub.s32 1, %s16
  %s19 = scalar_select 0, %s18, %s16
  $region1: #{transformer_classifier_forward.1} parent=0
    #allocation2 [shape = 'u8[8192]{0}', space=vmem, size = 0x2000, scoped, tag = 'output window, operand 0']
    #allocation3 [shape = 's32[2]{0}', space=sflag, size = 0x8, scoped, tag = 'scoped memory for transformer_classifier_forward.1']
    #allocation4 [shape = 'u8[8192]{0}', space=vmem, size = 0x2000, scoped, tag = 'output window, operand 1']
    #allocation5 [shape = 's32[2]{0}', space=sflag, size = 0x8, scoped, tag = 'scoped memory for transformer_classifier_forward.1']
    #allocation6 [shape = 'u8[8192]{0}', space=vmem, size = 0x2000, scoped, tag = 'output window, operand 2']
    #allocation7 [shape = 'u8[8192]{0}', space=vmem, size = 0x2000, scoped, tag = 'output window, operand 3']
    #allocation8 [shape = 's32[2]{0}', space=sflag, size = 0x8, scoped, tag = 'scoped memory for transformer_classifier_forward.1']
    #allocation9 [shape = 'u8[4096]{0}', space=vmem, size = 0x1000, scoped, tag = 'output window, operand 4, single buffered']
    %20 = vsyncpa [#allocation3], 0
    %s21 = scalar_lea.sflag [#allocation3], 1
    %22 = vsyncpa %s21, 0
    %23 = vsyncpa [#allocation5], 0
    %s24 = scalar_lea.sflag [#allocation5], 1
    %25 = vsyncpa %s24, 0
    %26 = vsyncpa [#allocation8], 0
    %s27 = scalar_lea.sflag [#allocation8], 1
    %28 = vsyncpa %s27, 0
    loop: start=0, step=1, limit=5
    $region2: #{transformer_classifier_forward.1} parent=1 // loop_pre_header
      _
    $region3: #{transformer_classifier_forward.1} parent=1 // loop_header
      %s30 = sphi 0, %s34
      %p31 = scmp.ge.s32.totalorder %s30, 5
      %s44 = sphi 0, %s46
      %s47 = sphi 0, %s44
      %s48 = sphi 0, %s47
      %s64 = sphi 0, %s48
      %s76 = sphi 0, %s78
      %s79 = sphi 0, %s76
      %s80 = sphi 0, %s79
      %s96 = sphi 0, %s80
      %s108 = sphi 0, %s110
      %s111 = sphi 0, %s108
      %s112 = sphi 0, %s111
      %s128 = sphi 0, %s112
      %s138 = sphi 0, %s140
      %s141 = sphi 0, %s138
      %s142 = sphi 0, %s141
      %s158 = sphi 0, %s142
      %s168 = sphi 0, %s170
      %s171 = sphi 0, %s168
      %s172 = sphi 0, %s171
      %s188 = sphi 0, %s172
      %s198 = sphi 0, %s200
      %s201 = sphi 0, %s198
      %s202 = sphi 0, %s201
      %s218 = sphi 0, %s202
      %s228 = sphi 0, %s230
      %s231 = sphi 0, %s228
      %s232 = sphi 0, %s231
      %s248 = sphi 0, %s232
      %s258 = sphi 0, %s260
      %s261 = sphi 0, %s258
      %s262 = sphi 0, %s261
      %s278 = sphi 0, %s262
      %s288 = sphi 0, %s290
      %s291 = sphi 0, %s288
      %s292 = sphi 0, %s291
      %s308 = sphi 0, %s292
      %s318 = sphi 0, %s320
      %s321 = sphi 0, %s318
      %s322 = sphi 0, %s321
      %s338 = sphi 0, %s322
      %s344 = sphi 0, %s346
      %s347 = sphi 0, %s344
      %s348 = sphi 0, %s347
      %s364 = sphi 0, %s348
      %s370 = sphi 0, %s372
      %s373 = sphi 0, %s370
      %s374 = sphi 0, %s373
      %s390 = sphi 0, %s374
      %s400 = sphi 0, %s402
      %s403 = sphi 0, %s400
      %s404 = sphi 0, %s403
      %s420 = sphi 0, %s404
      %s430 = sphi 0, %s432
      %s433 = sphi 0, %s430
      %s434 = sphi 0, %s433
      %s450 = sphi 0, %s434
      %s454 = sphi 0, %s454
      %s456 = sphi 0, %s454
      %s457 = sphi 0, %s456
      %s471 = sphi 0, %s457
    $region4: #{transformer_classifier_forward.1} parent=1 // loop_header_branch
      %33 = sbr.rel (%p31) target = $region8
    $region5: #{transformer_classifier_forward.1} parent=1 // loop_body
      %s35 = ssub.s32 %s30, 1
      %s36 = ssub.s32 %s30, 2
      %s37 = sadd.s32 %s30, 1
      %p38 = scmp.lt.s32.totalorder %s30, 1
      %s39 = scalar_select %p38, %s30, 1
      %p40 = scmp.lt.s32.totalorder %s37, 1
      %s41 = scalar_select %p40, %s37, 1
      %s42 = ssub.s32 %s39, %s41
      %p43 = scmp.eq.s32.totalorder %s42, 0
      %s45 = sadd.s32 %s44, 1
      %s46 = scalar_select %p43, %s44, %s45
      %p49 = pneg %p43
      %p50 = scmp.eq.s32.totalorder %s30, 2
      %p51 = por %p49, %p50
      %p52 = scmp.ne.s32.totalorder %s44, %s47
      %p53 = scmp.eq.s32.totalorder %s30, 0
      %p54 = por %p52, %p53
      %p55 = scmp.ne.s32.totalorder %s44, %s47
      %p56 = scmp.eq.s32.totalorder %s35, 2
      %p57 = por %p55, %p56
      %p58 = scmp.ne.s32.totalorder %s47, %s48
      %p59 = scmp.eq.s32.totalorder %s35, 0
      %p60 = por %p58, %p59
      %p61 = scmp.ne.s32.totalorder %s47, %s48
      %p62 = scmp.eq.s32.totalorder %s36, 2
      %p63 = por %p61, %p62
      %p65 = scmp.ne.s32.totalorder %s48, %s64
      %p66 = scmp.eq.s32.totalorder %s36, 0
      %p67 = por %p65, %p66
      %s68 = ssub.s32 %s30, 2
      %p69 = scmp.gt.s32.totalorder %s68, 0
      %s70 = scalar_select %p69, %s68, 0
      %s71 = ssub.s32 %s37, 2
      %p72 = scmp.gt.s32.totalorder %s71, 0
      %s73 = scalar_select %p72, %s71, 0
      %s74 = ssub.s32 %s70, %s73
      %p75 = scmp.eq.s32.totalorder %s74, 0
      %s77 = sadd.s32 %s76, 1
      %s78 = scalar_select %p75, %s76, %s77
      %p81 = pneg %p75
      %p82 = scmp.eq.s32.totalorder %s30, 2
      %p83 = por %p81, %p82
      %p84 = scmp.ne.s32.totalorder %s76, %s79
      %p85 = scmp.eq.s32.totalorder %s30, 0
      %p86 = por %p84, %p85
      %p87 = scmp.ne.s32.totalorder %s76, %s79
      %p88 = scmp.eq.s32.totalorder %s35, 2
      %p89 = por %p87, %p88
      %p90 = scmp.ne.s32.totalorder %s79, %s80
      %p91 = scmp.eq.s32.totalorder %s35, 0
      %p92 = por %p90, %p91
      %p93 = scmp.ne.s32.totalorder %s79, %s80
      %p94 = scmp.eq.s32.totalorder %s36, 2
      %p95 = por %p93, %p94
      %p97 = scmp.ne.s32.totalorder %s80, %s96
      %p98 = scmp.eq.s32.totalorder %s36, 0
      %p99 = por %p97, %p98
      %s100 = ssub.s32 %s30, 2
      %p101 = scmp.gt.s32.totalorder %s100, 0
      %s102 = scalar_select %p101, %s100, 0
      %s103 = ssub.s32 %s37, 2
      %p104 = scmp.gt.s32.totalorder %s103, 0
      %s105 = scalar_select %p104, %s103, 0
      %s106 = ssub.s32 %s102, %s105
      %p107 = scmp.eq.s32.totalorder %s106, 0
      %s109 = sadd.s32 %s108, 1
      %s110 = scalar_select %p107, %s108, %s109
      %p113 = pneg %p107
      %p114 = scmp.eq.s32.totalorder %s30, 2
      %p115 = por %p113, %p114
      %p116 = scmp.ne.s32.totalorder %s108, %s111
      %p117 = scmp.eq.s32.totalorder %s30, 0
      %p118 = por %p116, %p117
      %p119 = scmp.ne.s32.totalorder %s108, %s111
      %p120 = scmp.eq.s32.totalorder %s35, 2
      %p121 = por %p119, %p120
      %p122 = scmp.ne.s32.totalorder %s111, %s112
      %p123 = scmp.eq.s32.totalorder %s35, 0
      %p124 = por %p122, %p123
      %p125 = scmp.ne.s32.totalorder %s111, %s112
      %p126 = scmp.eq.s32.totalorder %s36, 2
      %p127 = por %p125, %p126
      %p129 = scmp.ne.s32.totalorder %s112, %s128
      %p130 = scmp.eq.s32.totalorder %s36, 0
      %p131 = por %p129, %p130
      %p132 = scmp.lt.s32.totalorder %s30, 1
      %s133 = scalar_select %p132, %s30, 1
      %p134 = scmp.lt.s32.totalorder %s37, 1
      %s135 = scalar_select %p134, %s37, 1
      %s136 = ssub.s32 %s133, %s135
      %p137 = scmp.eq.s32.totalorder %s136, 0
      %s139 = sadd.s32 %s138, 1
      %s140 = scalar_select %p137, %s138, %s139
      %p143 = pneg %p137
      %p144 = scmp.eq.s32.totalorder %s30, 2
      %p145 = por %p143, %p144
      %p146 = scmp.ne.s32.totalorder %s138, %s141
      %p147 = scmp.eq.s32.totalorder %s30, 0
      %p148 = por %p146, %p147
      %p149 = scmp.ne.s32.totalorder %s138, %s141
      %p150 = scmp.eq.s32.totalorder %s35, 2
      %p151 = por %p149, %p150
      %p152 = scmp.ne.s32.totalorder %s141, %s142
      %p153 = scmp.eq.s32.totalorder %s35, 0
      %p154 = por %p152, %p153
      %p155 = scmp.ne.s32.totalorder %s141, %s142
      %p156 = scmp.eq.s32.totalorder %s36, 2
      %p157 = por %p155, %p156
      %p159 = scmp.ne.s32.totalorder %s142, %s158
      %p160 = scmp.eq.s32.totalorder %s36, 0
      %p161 = por %p159, %p160
      %p162 = scmp.lt.s32.totalorder %s30, 1
      %s163 = scalar_select %p162, %s30, 1
      %p164 = scmp.lt.s32.totalorder %s37, 1
      %s165 = scalar_select %p164, %s37, 1
      %s166 = ssub.s32 %s163, %s165
      %p167 = scmp.eq.s32.totalorder %s166, 0
      %s169 = sadd.s32 %s168, 1
      %s170 = scalar_select %p167, %s168, %s169
      %p173 = pneg %p167
      %p174 = scmp.eq.s32.totalorder %s30, 2
      %p175 = por %p173, %p174
      %p176 = scmp.ne.s32.totalorder %s168, %s171
      %p177 = scmp.eq.s32.totalorder %s30, 0
      %p178 = por %p176, %p177
      %p179 = scmp.ne.s32.totalorder %s168, %s171
      %p180 = scmp.eq.s32.totalorder %s35, 2
      %p181 = por %p179, %p180
      %p182 = scmp.ne.s32.totalorder %s171, %s172
      %p183 = scmp.eq.s32.totalorder %s35, 0
      %p184 = por %p182, %p183
      %p185 = scmp.ne.s32.totalorder %s171, %s172
      %p186 = scmp.eq.s32.totalorder %s36, 2
      %p187 = por %p185, %p186
      %p189 = scmp.ne.s32.totalorder %s172, %s188
      %p190 = scmp.eq.s32.totalorder %s36, 0
      %p191 = por %p189, %p190
      %p192 = scmp.lt.s32.totalorder %s30, 1
      %s193 = scalar_select %p192, %s30, 1
      %p194 = scmp.lt.s32.totalorder %s37, 1
      %s195 = scalar_select %p194, %s37, 1
      %s196 = ssub.s32 %s193, %s195
      %p197 = scmp.eq.s32.totalorder %s196, 0
      %s199 = sadd.s32 %s198, 1
      %s200 = scalar_select %p197, %s198, %s199
      %p203 = pneg %p197
      %p204 = scmp.eq.s32.totalorder %s30, 2
      %p205 = por %p203, %p204
      %p206 = scmp.ne.s32.totalorder %s198, %s201
      %p207 = scmp.eq.s32.totalorder %s30, 0
      %p208 = por %p206, %p207
      %p209 = scmp.ne.s32.totalorder %s198, %s201
      %p210 = scmp.eq.s32.totalorder %s35, 2
      %p211 = por %p209, %p210
      %p212 = scmp.ne.s32.totalorder %s201, %s202
      %p213 = scmp.eq.s32.totalorder %s35, 0
      %p214 = por %p212, %p213
      %p215 = scmp.ne.s32.totalorder %s201, %s202
      %p216 = scmp.eq.s32.totalorder %s36, 2
      %p217 = por %p215, %p216
      %p219 = scmp.ne.s32.totalorder %s202, %s218
      %p220 = scmp.eq.s32.totalorder %s36, 0
      %p221 = por %p219, %p220
      %p222 = scmp.lt.s32.totalorder %s30, 1
      %s223 = scalar_select %p222, %s30, 1
      %p224 = scmp.lt.s32.totalorder %s37, 1
      %s225 = scalar_select %p224, %s37, 1
      %s226 = ssub.s32 %s223, %s225
      %p227 = scmp.eq.s32.totalorder %s226, 0
      %s229 = sadd.s32 %s228, 1
      %s230 = scalar_select %p227, %s228, %s229
      %p233 = pneg %p227
      %p234 = scmp.eq.s32.totalorder %s30, 2
      %p235 = por %p233, %p234
      %p236 = scmp.ne.s32.totalorder %s228, %s231
      %p237 = scmp.eq.s32.totalorder %s30, 0
      %p238 = por %p236, %p237
      %p239 = scmp.ne.s32.totalorder %s228, %s231
      %p240 = scmp.eq.s32.totalorder %s35, 2
      %p241 = por %p239, %p240
      %p242 = scmp.ne.s32.totalorder %s231, %s232
      %p243 = scmp.eq.s32.totalorder %s35, 0
      %p244 = por %p242, %p243
      %p245 = scmp.ne.s32.totalorder %s231, %s232
      %p246 = scmp.eq.s32.totalorder %s36, 2
      %p247 = por %p245, %p246
      %p249 = scmp.ne.s32.totalorder %s232, %s248
      %p250 = scmp.eq.s32.totalorder %s36, 0
      %p251 = por %p249, %p250
      %p252 = scmp.lt.s32.totalorder %s30, 1
      %s253 = scalar_select %p252, %s30, 1
      %p254 = scmp.lt.s32.totalorder %s37, 1
      %s255 = scalar_select %p254, %s37, 1
      %s256 = ssub.s32 %s253, %s255
      %p257 = scmp.eq.s32.totalorder %s256, 0
      %s259 = sadd.s32 %s258, 1
      %s260 = scalar_select %p257, %s258, %s259
      %p263 = pneg %p257
      %p264 = scmp.eq.s32.totalorder %s30, 2
      %p265 = por %p263, %p264
      %p266 = scmp.ne.s32.totalorder %s258, %s261
      %p267 = scmp.eq.s32.totalorder %s30, 0
      %p268 = por %p266, %p267
      %p269 = scmp.ne.s32.totalorder %s258, %s261
      %p270 = scmp.eq.s32.totalorder %s35, 2
      %p271 = por %p269, %p270
      %p272 = scmp.ne.s32.totalorder %s261, %s262
      %p273 = scmp.eq.s32.totalorder %s35, 0
      %p274 = por %p272, %p273
      %p275 = scmp.ne.s32.totalorder %s261, %s262
      %p276 = scmp.eq.s32.totalorder %s36, 2
      %p277 = por %p275, %p276
      %p279 = scmp.ne.s32.totalorder %s262, %s278
      %p280 = scmp.eq.s32.totalorder %s36, 0
      %p281 = por %p279, %p280
      %p282 = scmp.lt.s32.totalorder %s30, 1
      %s283 = scalar_select %p282, %s30, 1
      %p284 = scmp.lt.s32.totalorder %s37, 1
      %s285 = scalar_select %p284, %s37, 1
      %s286 = ssub.s32 %s283, %s285
      %p287 = scmp.eq.s32.totalorder %s286, 0
      %s289 = sadd.s32 %s288, 1
      %s290 = scalar_select %p287, %s288, %s289
      %p293 = pneg %p287
      %p294 = scmp.eq.s32.totalorder %s30, 2
      %p295 = por %p293, %p294
      %p296 = scmp.ne.s32.totalorder %s288, %s291
      %p297 = scmp.eq.s32.totalorder %s30, 0
      %p298 = por %p296, %p297
      %p299 = scmp.ne.s32.totalorder %s288, %s291
      %p300 = scmp.eq.s32.totalorder %s35, 2
      %p301 = por %p299, %p300
      %p302 = scmp.ne.s32.totalorder %s291, %s292
      %p303 = scmp.eq.s32.totalorder %s35, 0
      %p304 = por %p302, %p303
      %p305 = scmp.ne.s32.totalorder %s291, %s292
      %p306 = scmp.eq.s32.totalorder %s36, 2
      %p307 = por %p305, %p306
      %p309 = scmp.ne.s32.totalorder %s292, %s308
      %p310 = scmp.eq.s32.totalorder %s36, 0
      %p311 = por %p309, %p310
      %p312 = scmp.lt.s32.totalorder %s30, 1
      %s313 = scalar_select %p312, %s30, 1
      %p314 = scmp.lt.s32.totalorder %s37, 1
      %s315 = scalar_select %p314, %s37, 1
      %s316 = ssub.s32 %s313, %s315
      %p317 = scmp.eq.s32.totalorder %s316, 0
      %s319 = sadd.s32 %s318, 1
      %s320 = scalar_select %p317, %s318, %s319
      %p323 = pneg %p317
      %p324 = scmp.eq.s32.totalorder %s30, 2
      %p325 = por %p323, %p324
      %p326 = scmp.ne.s32.totalorder %s318, %s321
      %p327 = scmp.eq.s32.totalorder %s30, 0
      %p328 = por %p326, %p327
      %p329 = scmp.ne.s32.totalorder %s318, %s321
      %p330 = scmp.eq.s32.totalorder %s35, 2
      %p331 = por %p329, %p330
      %p332 = scmp.ne.s32.totalorder %s321, %s322
      %p333 = scmp.eq.s32.totalorder %s35, 0
      %p334 = por %p332, %p333
      %p335 = scmp.ne.s32.totalorder %s321, %s322
      %p336 = scmp.eq.s32.totalorder %s36, 2
      %p337 = por %p335, %p336
      %p339 = scmp.ne.s32.totalorder %s322, %s338
      %p340 = scmp.eq.s32.totalorder %s36, 0
      %p341 = por %p339, %p340
      %s342 = ssub.s32 %s30, %s37
      %p343 = scmp.eq.s32.totalorder %s342, 0
      %s345 = sadd.s32 %s344, 1
      %s346 = scalar_select %p343, %s344, %s345
      %p349 = pneg %p343
      %p350 = scmp.eq.s32.totalorder %s30, 2
      %p351 = por %p349, %p350
      %p352 = scmp.ne.s32.totalorder %s344, %s347
      %p353 = scmp.eq.s32.totalorder %s30, 0
      %p354 = por %p352, %p353
      %p355 = scmp.ne.s32.totalorder %s344, %s347
      %p356 = scmp.eq.s32.totalorder %s35, 2
      %p357 = por %p355, %p356
      %p358 = scmp.ne.s32.totalorder %s347, %s348
      %p359 = scmp.eq.s32.totalorder %s35, 0
      %p360 = por %p358, %p359
      %p361 = scmp.ne.s32.totalorder %s347, %s348
      %p362 = scmp.eq.s32.totalorder %s36, 2
      %p363 = por %p361, %p362
      %p365 = scmp.ne.s32.totalorder %s348, %s364
      %p366 = scmp.eq.s32.totalorder %s36, 0
      %p367 = por %p365, %p366
      %s368 = ssub.s32 %s30, %s37
      %p369 = scmp.eq.s32.totalorder %s368, 0
      %s371 = sadd.s32 %s370, 1
      %s372 = scalar_select %p369, %s370, %s371
      %p375 = pneg %p369
      %p376 = scmp.eq.s32.totalorder %s30, 2
      %p377 = por %p375, %p376
      %p378 = scmp.ne.s32.totalorder %s370, %s373
      %p379 = scmp.eq.s32.totalorder %s30, 0
      %p380 = por %p378, %p379
      %p381 = scmp.ne.s32.totalorder %s370, %s373
      %p382 = scmp.eq.s32.totalorder %s35, 2
      %p383 = por %p381, %p382
      %p384 = scmp.ne.s32.totalorder %s373, %s374
      %p385 = scmp.eq.s32.totalorder %s35, 0
      %p386 = por %p384, %p385
      %p387 = scmp.ne.s32.totalorder %s373, %s374
      %p388 = scmp.eq.s32.totalorder %s36, 2
      %p389 = por %p387, %p388
      %p391 = scmp.ne.s32.totalorder %s374, %s390
      %p392 = scmp.eq.s32.totalorder %s36, 0
      %p393 = por %p391, %p392
      %p394 = scmp.lt.s32.totalorder %s30, 1
      %s395 = scalar_select %p394, %s30, 1
      %p396 = scmp.lt.s32.totalorder %s37, 1
      %s397 = scalar_select %p396, %s37, 1
      %s398 = ssub.s32 %s395, %s397
      %p399 = scmp.eq.s32.totalorder %s398, 0
      %s401 = sadd.s32 %s400, 1
      %s402 = scalar_select %p399, %s400, %s401
      %p405 = pneg %p399
      %p406 = scmp.eq.s32.totalorder %s30, 2
      %p407 = por %p405, %p406
      %p408 = scmp.ne.s32.totalorder %s400, %s403
      %p409 = scmp.eq.s32.totalorder %s30, 0
      %p410 = por %p408, %p409
      %p411 = scmp.ne.s32.totalorder %s400, %s403
      %p412 = scmp.eq.s32.totalorder %s35, 2
      %p413 = por %p411, %p412
      %p414 = scmp.ne.s32.totalorder %s403, %s404
      %p415 = scmp.eq.s32.totalorder %s35, 0
      %p416 = por %p414, %p415
      %p417 = scmp.ne.s32.totalorder %s403, %s404
      %p418 = scmp.eq.s32.totalorder %s36, 2
      %p419 = por %p417, %p418
      %p421 = scmp.ne.s32.totalorder %s404, %s420
      %p422 = scmp.eq.s32.totalorder %s36, 0
      %p423 = por %p421, %p422
      %p424 = scmp.lt.s32.totalorder %s30, 1
      %s425 = scalar_select %p424, %s30, 1
      %p426 = scmp.lt.s32.totalorder %s37, 1
      %s427 = scalar_select %p426, %s37, 1
      %s428 = ssub.s32 %s425, %s427
      %p429 = scmp.eq.s32.totalorder %s428, 0
      %s431 = sadd.s32 %s430, 1
      %s432 = scalar_select %p429, %s430, %s431
      %p435 = pneg %p429
      %p436 = scmp.eq.s32.totalorder %s30, 2
      %p437 = por %p435, %p436
      %p438 = scmp.ne.s32.totalorder %s430, %s433
      %p439 = scmp.eq.s32.totalorder %s30, 0
      %p440 = por %p438, %p439
      %p441 = scmp.ne.s32.totalorder %s430, %s433
      %p442 = scmp.eq.s32.totalorder %s35, 2
      %p443 = por %p441, %p442
      %p444 = scmp.ne.s32.totalorder %s433, %s434
      %p445 = scmp.eq.s32.totalorder %s35, 0
      %p446 = por %p444, %p445
      %p447 = scmp.ne.s32.totalorder %s433, %s434
      %p448 = scmp.eq.s32.totalorder %s36, 2
      %p449 = por %p447, %p448
      %p451 = scmp.ne.s32.totalorder %s434, %s450
      %p452 = scmp.eq.s32.totalorder %s36, 0
      %p453 = por %p451, %p452
      %s455 = sadd.s32 %s454, 1
      %p458 = scmp.eq.s32.totalorder %s30, 2
      %p459 = scmp.ne.s32.totalorder %s454, %s456
      %p460 = scmp.eq.s32.totalorder %s30, 0
      %p461 = por %p459, %p460
      %p462 = scmp.ne.s32.totalorder %s454, %s456
      %p463 = scmp.eq.s32.totalorder %s35, 2
      %p464 = por %p462, %p463
      %p465 = scmp.ne.s32.totalorder %s456, %s457
      %p466 = scmp.eq.s32.totalorder %s35, 0
      %p467 = por %p465, %p466
      %p468 = scmp.ne.s32.totalorder %s456, %s457
      %p469 = scmp.eq.s32.totalorder %s36, 2
      %p470 = por %p468, %p469
      %p472 = scmp.ne.s32.totalorder %s457, %s471
      %p473 = scmp.eq.s32.totalorder %s36, 0
      %p474 = por %p472, %p473
      %p475 = scmp.le.s32.totalorder 1, %s30
      %p476 = scmp.lt.s32.totalorder %s30, 4
      %p477 = pnand %p475, %p476
      %p478 = pneg %p477
      // Predicated region
      $region9: #{transformer_classifier_forward.1} parent=5 // pred_check
        _
      $region10: #{transformer_classifier_forward.1} parent=5 // pred_check_branch
        %480 = sbr.rel (%p477) target = $region12
      $region11: #{transformer_classifier_forward.1} parent=5 // pred_region
        %s481 = ssub.s32 %s30, 1
      $region12: #{transformer_classifier_forward.1} parent=5 // pred_fallthru
        _
      %p482 = scmp.lt.s32.totalorder %s30, 3
      // Predicated region
      $region13: #{transformer_classifier_forward.1} parent=5 // pred_check
        %p483 = pneg %p482
      $region14: #{transformer_classifier_forward.1} parent=5 // pred_check_branch
        %485 = sbr.rel (%p483) target = $region16
      $region15: #{transformer_classifier_forward.1} parent=5 // pred_region
        // Predicated region
        $region17: #{transformer_classifier_forward.1} parent=15 // pred_check
          %p486 = pneg %p54
        $region18: #{transformer_classifier_forward.1} parent=15 // pred_check_branch
          %488 = sbr.rel (%p486) target = $region20
        $region19: #{transformer_classifier_forward.1} parent=15 // pred_region
          %p489 = scmp.lt.s32.totalorder %s30, 1
          %s490 = scalar_select %p489, %s30, 1
          %p491 = scmp.lt.s32.totalorder %s490, 15
          %s492 = scalar_select %p491, %s490, 15
          %s493 = smul.addr %s492, 8
          %s494 = scalar_lea.vmem %s0, %s493
          %p495 = scmp.lt.s32.totalorder %s30, 1
          %s496 = scalar_select %p495, %s30, 1
        $region20: #{transformer_classifier_forward.1} parent=15 // pred_fallthru
          _
        // Predicated region
        $region21: #{transformer_classifier_forward.1} parent=15 // pred_check
          %p497 = pneg %p86
        $region22: #{transformer_classifier_forward.1} parent=15 // pred_check_branch
          %499 = sbr.rel (%p497) target = $region24
        $region23: #{transformer_classifier_forward.1} parent=15 // pred_region
          %s500 = ssub.s32 %s30, 2
          %p501 = scmp.gt.s32.totalorder %s500, 0
          %s502 = scalar_select %p501, %s500, 0
          %p503 = scmp.lt.s32.totalorder %s502, 0
          %s504 = scalar_select %p503, %s502, 0
          %s505 = smul.addr %s504, 8
          %s506 = scalar_lea.vmem %s1, %s505
          %s507 = ssub.s32 %s30, 2
          %p508 = scmp.gt.s32.totalorder %s507, 0
          %s509 = scalar_select %p508, %s507, 0
        $region24: #{transformer_classifier_forward.1} parent=15 // pred_fallthru
          _
        // Predicated region
        $region25: #{transformer_classifier_forward.1} parent=15 // pred_check
          %p510 = pneg %p118
        $region26: #{transformer_classifier_forward.1} parent=15 // pred_check_branch
          %512 = sbr.rel (%p510) target = $region28
        $region27: #{transformer_classifier_forward.1} parent=15 // pred_region
          %s513 = ssub.s32 %s30, 2
          %p514 = scmp.gt.s32.totalorder %s513, 0
          %s515 = scalar_select %p514, %s513, 0
          %p516 = scmp.lt.s32.totalorder %s515, 0
          %s517 = scalar_select %p516, %s515, 0
          %s518 = smul.addr %s517, 8
          %s519 = scalar_lea.vmem %s2, %s518
          %s520 = ssub.s32 %s30, 2
          %p521 = scmp.gt.s32.totalorder %s520, 0
          %s522 = scalar_select %p521, %s520, 0
        $region28: #{transformer_classifier_forward.1} parent=15 // pred_fallthru
          _
        // Predicated region
        $region29: #{transformer_classifier_forward.1} parent=15 // pred_check
          %p523 = pneg %p148
        $region30: #{transformer_classifier_forward.1} parent=15 // pred_check_branch
          %525 = sbr.rel (%p523) target = $region32
        $region31: #{transformer_classifier_forward.1} parent=15 // pred_region
          %p526 = scmp.lt.s32.totalorder %s30, 1
          %s527 = scalar_select %p526, %s30, 1
          %p528 = scmp.lt.s32.totalorder %s527, 1
          %s529 = scalar_select %p528, %s527, 1
          %s530 = scalar_lea.vmem %s3, %s529
          %p531 = scmp.lt.s32.totalorder %s30, 1
          %s532 = scalar_select %p531, %s30, 1
        $region32: #{transformer_classifier_forward.1} parent=15 // pred_fallthru
          _
        // Predicated region
        $region33: #{transformer_classifier_forward.1} parent=15 // pred_check
          %p533 = pneg %p178
        $region34: #{transformer_classifier_forward.1} parent=15 // pred_check_branch
          %535 = sbr.rel (%p533) target = $region36
        $region35: #{transformer_classifier_forward.1} parent=15 // pred_region
          %p536 = scmp.lt.s32.totalorder %s30, 1
          %s537 = scalar_select %p536, %s30, 1
          %p538 = scmp.lt.s32.totalorder %s537, 1
          %s539 = scalar_select %p538, %s537, 1
          %s540 = scalar_lea.vmem %s4, %s539
          %p541 = scmp.lt.s32.totalorder %s30, 1
          %s542 = scalar_select %p541, %s30, 1
        $region36: #{transformer_classifier_forward.1} parent=15 // pred_fallthru
          _
        // Predicated region
        $region37: #{transformer_classifier_forward.1} parent=15 // pred_check
          %p543 = pneg %p208
        $region38: #{transformer_classifier_forward.1} parent=15 // pred_check_branch
          %545 = sbr.rel (%p543) target = $region40
        $region39: #{transformer_classifier_forward.1} parent=15 // pred_region
          %p546 = scmp.lt.s32.totalorder %s30, 1
          %s547 = scalar_select %p546, %s30, 1
          %p548 = scmp.lt.s32.totalorder %s547, 1
          %s549 = scalar_select %p548, %s547, 1
          %s550 = scalar_lea.vmem %s5, %s549
          %p551 = scmp.lt.s32.totalorder %s30, 1
          %s552 = scalar_select %p551, %s30, 1
        $region40: #{transformer_classifier_forward.1} parent=15 // pred_fallthru
          _
        // Predicated region
        $region41: #{transformer_classifier_forward.1} parent=15 // pred_check
          %p553 = pneg %p238
        $region42: #{transformer_classifier_forward.1} parent=15 // pred_check_branch
          %555 = sbr.rel (%p553) target = $region44
        $region43: #{transformer_classifier_forward.1} parent=15 // pred_region
          %p556 = scmp.lt.s32.totalorder %s30, 1
          %s557 = scalar_select %p556, %s30, 1
          %p558 = scmp.lt.s32.totalorder %s557, 1
          %s559 = scalar_select %p558, %s557, 1
          %s560 = scalar_lea.vmem %s6, %s559
          %p561 = scmp.lt.s32.totalorder %s30, 1
          %s562 = scalar_select %p561, %s30, 1
        $region44: #{transformer_classifier_forward.1} parent=15 // pred_fallthru
          _
        // Predicated region
        $region45: #{transformer_classifier_forward.1} parent=15 // pred_check
          %p563 = pneg %p268
        $region46: #{transformer_classifier_forward.1} parent=15 // pred_check_branch
          %565 = sbr.rel (%p563) target = $region48
        $region47: #{transformer_classifier_forward.1} parent=15 // pred_region
          %p566 = scmp.lt.s32.totalorder %s30, 1
          %s567 = scalar_select %p566, %s30, 1
          %p568 = scmp.lt.s32.totalorder %s567, 1
          %s569 = scalar_select %p568, %s567, 1
          %s570 = scalar_lea.vmem %s7, %s569
          %p571 = scmp.lt.s32.totalorder %s30, 1
          %s572 = scalar_select %p571, %s30, 1
        $region48: #{transformer_classifier_forward.1} parent=15 // pred_fallthru
          _
        // Predicated region
        $region49: #{transformer_classifier_forward.1} parent=15 // pred_check
          %p573 = pneg %p298
        $region50: #{transformer_classifier_forward.1} parent=15 // pred_check_branch
          %575 = sbr.rel (%p573) target = $region52
        $region51: #{transformer_classifier_forward.1} parent=15 // pred_region
          %p576 = scmp.lt.s32.totalorder %s30, 1
          %s577 = scalar_select %p576, %s30, 1
          %p578 = scmp.lt.s32.totalorder %s577, 1
          %s579 = scalar_select %p578, %s577, 1
          %s580 = scalar_lea.vmem %s8, %s579
          %p581 = scmp.lt.s32.totalorder %s30, 1
          %s582 = scalar_select %p581, %s30, 1
        $region52: #{transformer_classifier_forward.1} parent=15 // pred_fallthru
          _
        // Predicated region
        $region53: #{transformer_classifier_forward.1} parent=15 // pred_check
          %p583 = pneg %p328
        $region54: #{transformer_classifier_forward.1} parent=15 // pred_check_branch
          %585 = sbr.rel (%p583) target = $region56
        $region55: #{transformer_classifier_forward.1} parent=15 // pred_region
          %p586 = scmp.lt.s32.totalorder %s30, 1
          %s587 = scalar_select %p586, %s30, 1
          %s588 = smul.u32 16, %s587
          %p589 = scmp.lt.s32.totalorder %s588, 31
          %s590 = scalar_select %p589, %s588, 31
          %s591 = smul.addr %s590, 4
          %s592 = scalar_lea.vmem %s9, %s591
          %p593 = scmp.lt.s32.totalorder %s30, 1
          %s594 = scalar_select %p593, %s30, 1
          %s595 = smul.u32 16, %s594
        $region56: #{transformer_classifier_forward.1} parent=15 // pred_fallthru
          _
      $region16: #{transformer_classifier_forward.1} parent=5 // pred_fallthru
        _
      %p596 = scmp.le.s32.totalorder 1, %s30
      %p597 = scmp.lt.s32.totalorder %s30, 4
      %p598 = pnand %p596, %p597
      %p599 = pneg %p598
      // Predicated region
      $region57: #{transformer_classifier_forward.1} parent=5 // pred_check
        _
      $region58: #{transformer_classifier_forward.1} parent=5 // pred_check_branch
        %601 = sbr.rel (%p598) target = $region60
      $region59: #{transformer_classifier_forward.1} parent=5 // pred_region
        %s602 = ssub.s32 %s30, 1
        %p603 = scmp.lt.s32.totalorder %s35, 1
        %s604 = scalar_select %p603, %s35, 1
        %p605 = scmp.lt.s32.totalorder %s604, 15
        %s606 = scalar_select %p605, %s604, 15
        %s607 = smul.addr %s606, 8
        %s608 = scalar_lea.vmem %s0, %s607
        %p609 = pneg %p60
        %p610 = pneg %p57
        %s611 = ssub.s32 %s35, 2
        %p612 = scmp.gt.s32.totalorder %s611, 0
        %s613 = scalar_select %p612, %s611, 0
        %p614 = scmp.lt.s32.totalorder %s613, 0
        %s615 = scalar_select %p614, %s613, 0
        %s616 = smul.addr %s615, 8
        %s617 = scalar_lea.vmem %s1, %s616
        %p618 = pneg %p92
        %p619 = pneg %p89
        %s620 = ssub.s32 %s35, 2
        %p621 = scmp.gt.s32.totalorder %s620, 0
        %s622 = scalar_select %p621, %s620, 0
        %p623 = scmp.lt.s32.totalorder %s622, 0
        %s624 = scalar_select %p623, %s622, 0
        %s625 = smul.addr %s624, 8
        %s626 = scalar_lea.vmem %s2, %s625
        %p627 = pneg %p124
        %p628 = pneg %p121
        %p629 = scmp.lt.s32.totalorder %s35, 1
        %s630 = scalar_select %p629, %s35, 1
        %p631 = scmp.lt.s32.totalorder %s630, 1
        %s632 = scalar_select %p631, %s630, 1
        %s633 = scalar_lea.vmem %s3, %s632
        %p634 = pneg %p154
        %p635 = pneg %p151
        %p636 = scmp.lt.s32.totalorder %s35, 1
        %s637 = scalar_select %p636, %s35, 1
        %p638 = scmp.lt.s32.totalorder %s637, 1
        %s639 = scalar_select %p638, %s637, 1
        %s640 = scalar_lea.vmem %s4, %s639
        %p641 = pneg %p184
        %p642 = pneg %p181
        %p643 = scmp.lt.s32.totalorder %s35, 1
        %s644 = scalar_select %p643, %s35, 1
        %p645 = scmp.lt.s32.totalorder %s644, 1
        %s646 = scalar_select %p645, %s644, 1
        %s647 = scalar_lea.vmem %s5, %s646
        %p648 = pneg %p214
        %p649 = pneg %p211
        %p650 = scmp.lt.s32.totalorder %s35, 1
        %s651 = scalar_select %p650, %s35, 1
        %p652 = scmp.lt.s32.totalorder %s651, 1
        %s653 = scalar_select %p652, %s651, 1
        %s654 = scalar_lea.vmem %s6, %s653
        %p655 = pneg %p244
        %p656 = pneg %p241
        %p657 = scmp.lt.s32.totalorder %s35, 1
        %s658 = scalar_select %p657, %s35, 1
        %p659 = scmp.lt.s32.totalorder %s658, 1
        %s660 = scalar_select %p659, %s658, 1
        %s661 = scalar_lea.vmem %s7, %s660
        %p662 = pneg %p274
        %p663 = pneg %p271
        %p664 = scmp.lt.s32.totalorder %s35, 1
        %s665 = scalar_select %p664, %s35, 1
        %p666 = scmp.lt.s32.totalorder %s665, 1
        %s667 = scalar_select %p666, %s665, 1
        %s668 = scalar_lea.vmem %s8, %s667
        %p669 = pneg %p304
        %p670 = pneg %p301
        %p671 = scmp.lt.s32.totalorder %s35, 1
        %s672 = scalar_select %p671, %s35, 1
        %s673 = smul.u32 16, %s672
        %p674 = scmp.lt.s32.totalorder %s673, 31
        %s675 = scalar_select %p674, %s673, 31
        %s676 = smul.addr %s675, 4
        %s677 = scalar_lea.vmem %s9, %s676
        %p678 = pneg %p334
        %p679 = pneg %p331
        %p680 = pneg %p360
        %p681 = pneg %p357
        %s682 = sand.u32 %s347, 1
        %s683 = scalar_lea.sflag [#allocation3], %s682
        %s684 = sand.u32 %s347, 1
        %s685 = smul.addr %s684, 8
        %s686 = scalar_lea.vmem [#allocation2], %s685
        %p687 = pneg %p386
        %p688 = pneg %p383
        %s689 = sand.u32 %s35, 1
        %s690 = scalar_lea.sflag [#allocation5], %s689
        %s691 = sand.u32 %s373, 1
        %s692 = smul.addr %s691, 8
        %s693 = scalar_lea.vmem [#allocation4], %s692
        %p694 = pneg %p416
        %p695 = pneg %p413
        %s696 = sand.u32 %s35, 1
        %s697 = scalar_lea.sflag [#allocation5], %s696
        %s698 = sand.u32 %s403, 1
        %s699 = smul.addr %s698, 8
        %s700 = scalar_lea.vmem [#allocation6], %s699
        %p701 = pneg %p446
        %p702 = pneg %p443
        %s703 = sand.u32 %s35, 1
        %s704 = scalar_lea.sflag [#allocation8], %s703
        %s705 = sand.u32 %s433, 1
        %s706 = smul.addr %s705, 8
        %s707 = scalar_lea.vmem [#allocation7], %s706
        %p708 = pneg %p467
        %p709 = pneg %p464
        %p710 = scmp.lt.s32.totalorder %s35, 1
        %s711 = scalar_select %p710, %s35, 1
        %p712 = scmp.lt.s32.totalorder %s711, 15
        %s713 = scalar_select %p712, %s711, 15
        %s714 = smul.addr %s713, 8
        %s715 = scalar_lea.vmem %s0, %s714
        %p716 = scmp.lt.s32.totalorder %s35, 1
        %s717 = scalar_select %p716, %s35, 1
        %s718 = ssub.s32 %s35, 2
        %p719 = scmp.gt.s32.totalorder %s718, 0
        %s720 = scalar_select %p719, %s718, 0
        %p721 = scmp.lt.s32.totalorder %s720, 0
        %s722 = scalar_select %p721, %s720, 0
        %s723 = smul.addr %s722, 8
        %s724 = scalar_lea.vmem %s1, %s723
        %s725 = ssub.s32 %s35, 2
        %p726 = scmp.gt.s32.totalorder %s725, 0
        %s727 = scalar_select %p726, %s725, 0
        %s728 = ssub.s32 %s35, 2
        %p729 = scmp.gt.s32.totalorder %s728, 0
        %s730 = scalar_select %p729, %s728, 0
        %p731 = scmp.lt.s32.totalorder %s730, 0
        %s732 = scalar_select %p731, %s730, 0
        %s733 = smul.addr %s732, 8
        %s734 = scalar_lea.vmem %s2, %s733
        %s735 = ssub.s32 %s35, 2
        %p736 = scmp.gt.s32.totalorder %s735, 0
        %s737 = scalar_select %p736, %s735, 0
        %p738 = scmp.lt.s32.totalorder %s35, 1
        %s739 = scalar_select %p738, %s35, 1
        %p740 = scmp.lt.s32.totalorder %s739, 1
        %s741 = scalar_select %p740, %s739, 1
        %s742 = scalar_lea.vmem %s3, %s741
        %p743 = scmp.lt.s32.totalorder %s35, 1
        %s744 = scalar_select %p743, %s35, 1
        %p745 = scmp.lt.s32.totalorder %s35, 1
        %s746 = scalar_select %p745, %s35, 1
        %p747 = scmp.lt.s32.totalorder %s746, 1
        %s748 = scalar_select %p747, %s746, 1
        %s749 = scalar_lea.vmem %s4, %s748
        %p750 = scmp.lt.s32.totalorder %s35, 1
        %s751 = scalar_select %p750, %s35, 1
        %p752 = scmp.lt.s32.totalorder %s35, 1
        %s753 = scalar_select %p752, %s35, 1
        %p754 = scmp.lt.s32.totalorder %s753, 1
        %s755 = scalar_select %p754, %s753, 1
        %s756 = scalar_lea.vmem %s5, %s755
        %p757 = scmp.lt.s32.totalorder %s35, 1
        %s758 = scalar_select %p757, %s35, 1
        %p759 = scmp.lt.s32.totalorder %s35, 1
        %s760 = scalar_select %p759, %s35, 1
        %p761 = scmp.lt.s32.totalorder %s760, 1
        %s762 = scalar_select %p761, %s760, 1
        %s763 = scalar_lea.vmem %s6, %s762
        %p764 = scmp.lt.s32.totalorder %s35, 1
        %s765 = scalar_select %p764, %s35, 1
        %p766 = scmp.lt.s32.totalorder %s35, 1
        %s767 = scalar_select %p766, %s35, 1
        %p768 = scmp.lt.s32.totalorder %s767, 1
        %s769 = scalar_select %p768, %s767, 1
        %s770 = scalar_lea.vmem %s7, %s769
        %p771 = scmp.lt.s32.totalorder %s35, 1
        %s772 = scalar_select %p771, %s35, 1
        %p773 = scmp.lt.s32.totalorder %s35, 1
        %s774 = scalar_select %p773, %s35, 1
        %p775 = scmp.lt.s32.totalorder %s774, 1
        %s776 = scalar_select %p775, %s774, 1
        %s777 = scalar_lea.vmem %s8, %s776
        %p778 = scmp.lt.s32.totalorder %s35, 1
        %s779 = scalar_select %p778, %s35, 1
        %p780 = scmp.lt.s32.totalorder %s35, 1
        %s781 = scalar_select %p780, %s35, 1
        %s782 = smul.u32 16, %s781
        %p783 = scmp.lt.s32.totalorder %s782, 31
        %s784 = scalar_select %p783, %s782, 31
        %s785 = smul.addr %s784, 4
        %s786 = scalar_lea.vmem %s9, %s785
        %p787 = scmp.lt.s32.totalorder %s35, 1
        %s788 = scalar_select %p787, %s35, 1
        %s789 = smul.u32 16, %s788
        %p790 = scmp.lt.s32.totalorder %s35, 1
        %s791 = scalar_select %p790, %s35, 1
        %p792 = scmp.lt.s32.totalorder %s35, 1
        %s793 = scalar_select %p792, %s35, 1
        %p795 = scmp.eq.s32.totalorder %s35, 0
        // Predicated region
        $region61: #{transformer_classifier_forward.1} parent=59 // pred_check
          %p796 = pneg %p795
        $region62: #{transformer_classifier_forward.1} parent=59 // pred_check_branch
          %798 = sbr.rel (%p796) target = $region64
        $region63: #{transformer_classifier_forward.1} parent=59 // pred_region
          %799 = vst [vmem:[#allocation9] sm:$0xff] 0.0
        $region64: #{transformer_classifier_forward.1} parent=59 // pred_fallthru
          _
        %p800 = scmp.lt.s32.totalorder %s35, 2
        // Predicated region
        $region65: #{transformer_classifier_forward.1} parent=59 // pred_check
          %p801 = pneg %p800
        $region66: #{transformer_classifier_forward.1} parent=59 // pred_check_branch
          %803 = sbr.rel (%p801) target = $region68
        $region67: #{transformer_classifier_forward.1} parent=59 // pred_region
          %v804 = vld [vmem:[%s715] sm:$0xff]
          %v805 = vrot.slane %v804, 4
          %v806 = vadd.f32 %v804, %v805
          %v807 = vrot.slane %v806, 2
          %v808 = vadd.f32 %v806, %v807
          %v809 = vrot.slane %v808, 1
          %v810 = vadd.f32 %v808, %v809
          %v811 = vrcp.pop 8.0
          %v812 = vmul.f32 %v810, %v811
          %v813 = vsub.f32 %v804, %v812
          %v814 = vmul.f32 %v813, %v813
          %v815 = vrot.slane %v814, 4
          %v816 = vadd.f32 %v814, %v815
          %v817 = vrot.slane %v816, 2
          %v818 = vadd.f32 %v816, %v817
          %v819 = vrot.slane %v818, 1
          %v820 = vadd.f32 %v818, %v819
          %v821 = vmul.f32 %v820, %v811
          %v822 = vadd.f32 %v821, 1e-05
          %v823 = vrsqrt.pop %v822
          %v824 = vmul.f32 %v813, %v823
          %v825 = vld [vmem:[%s742] sm:$0x1]
          %v827 = vlaneseq
          %v828 = vshrl.u32 %v827, 7
          %v829 = vsub.s32 0, %v828
          %v830 = vrot.slane %v825, %v829
          %v832 = vmul.f32 %v824, %v830
          %v833 = vld [vmem:[%s749] sm:$0x1]
          %v835 = vlaneseq
          %v836 = vshrl.u32 %v835, 7
          %v837 = vsub.s32 0, %v836
          %v838 = vrot.slane %v833, %v837
          %v840 = vadd.f32 %v832, %v838
          %v841 = vld [vmem:[%s756] sm:$0x1]
          %v843 = vlaneseq
          %v844 = vshrl.u32 %v843, 7
          %v845 = vsub.s32 0, %v844
          %v846 = vrot.slane %v841, %v845
          %v848 = vmul.f32 %v824, %v846
          %v849 = vld [vmem:[%s763] sm:$0x1]
          %v851 = vlaneseq
          %v852 = vshrl.u32 %v851, 7
          %v853 = vsub.s32 0, %v852
          %v854 = vrot.slane %v849, %v853
          %v856 = vadd.f32 %v848, %v854
          %v857 = vrot.slane %v856, 4
          %v858 = vadd.f32 %v856, %v857
          %v859 = vrot.slane %v858, 2
          %v860 = vadd.f32 %v858, %v859
          %v861 = vrot.slane %v860, 1
          %v862 = vadd.f32 %v860, %v861
          %v863 = vmul.f32 %v862, %v811
          %v864 = vsub.f32 %v856, %v863
          %v865 = vmul.f32 %v864, %v864
          %v866 = vrot.slane %v865, 4
          %v867 = vadd.f32 %v865, %v866
          %v868 = vrot.slane %v867, 2
          %v869 = vadd.f32 %v867, %v868
          %v870 = vrot.slane %v869, 1
          %v871 = vadd.f32 %v869, %v870
          %v872 = vmul.f32 %v871, %v811
          %v873 = vadd.f32 %v872, 1e-05
          %v874 = vrsqrt.pop %v873
          %v875 = vmul.f32 %v864, %v874
          %v876 = vld [vmem:[%s770] sm:$0x1]
          %v878 = vlaneseq
          %v879 = vshrl.u32 %v878, 7
          %v880 = vsub.s32 0, %v879
          %v881 = vrot.slane %v876, %v880
          %v883 = vmul.f32 %v875, %v881
          %v884 = vld [vmem:[%s777] sm:$0x1]
          %v886 = vlaneseq
          %v887 = vshrl.u32 %v886, 7
          %v888 = vsub.s32 0, %v887
          %v889 = vrot.slane %v884, %v888
          %v891 = vadd.f32 %v883, %v889
          %892 = vst [vmem:[%s686] sm:$0xff] %v804
          %893 = vst [vmem:[%s693] sm:$0xff] %v840
          %894 = vst [vmem:[%s700] sm:$0xff] %v856
          %895 = vst [vmem:[%s707] sm:$0xff] %v891
          %v896 = vld [vmem:[#allocation9] sm:$0xff]
          %v897 = vpack.c.bf16 %v891, %v891
          %v898 = vld [vmem:[%s786] sm:$0xf]
          %v899 = vld [vmem:[%s786 + $0x4] sm:$0xf]
          %v900 = vld [vmem:[%s786 + $0x8] sm:$0xf]
          %v901 = vld [vmem:[%s786 + $0xc] sm:$0xf]
          %v902 = vld [vmem:[%s786 + $0x10] sm:$0xf]
          %v903 = vld [vmem:[%s786 + $0x14] sm:$0xf]
          %v904 = vld [vmem:[%s786 + $0x18] sm:$0xf]
          %v905 = vld [vmem:[%s786 + $0x1c] sm:$0xf]
          %v906 = vld [vmem:[%s786 + $0x20] sm:$0xf]
          %v907 = vld [vmem:[%s786 + $0x24] sm:$0xf]
          %v908 = vld [vmem:[%s786 + $0x28] sm:$0xf]
          %v909 = vld [vmem:[%s786 + $0x2c] sm:$0xf]
          %v910 = vld [vmem:[%s786 + $0x30] sm:$0xf]
          %v911 = vld [vmem:[%s786 + $0x34] sm:$0xf]
          %v912 = vld [vmem:[%s786 + $0x38] sm:$0xf]
          %v913 = vld [vmem:[%s786 + $0x3c] sm:$0xf]
          %v930 = vunpack.c.l.b16 %v898
          %v931 = vunpack.c.l.b16 %v899
          %v932 = vunpack.c.l.b16 %v900
          %v933 = vunpack.c.l.b16 %v901
          %v934 = vunpack.c.l.b16 %v902
          %v935 = vunpack.c.l.b16 %v903
          %v936 = vunpack.c.l.b16 %v904
          %v937 = vunpack.c.l.b16 %v905
          %v938 = vunpack.c.l.b16 %v906
          %v939 = vunpack.c.l.b16 %v907
          %v940 = vunpack.c.l.b16 %v908
          %v941 = vunpack.c.l.b16 %v909
          %v942 = vunpack.c.l.b16 %v910
          %v943 = vunpack.c.l.b16 %v911
          %v944 = vunpack.c.l.b16 %v912
          %v945 = vunpack.c.l.b16 %v913
          %v946 = vpack.c.b16 %v931, %v930
          %v947 = vpack.c.b16 %v933, %v932
          %v948 = vpack.c.b16 %v935, %v934
          %v949 = vpack.c.b16 %v937, %v936
          %v950 = vpack.c.b16 %v939, %v938
          %v951 = vpack.c.b16 %v941, %v940
          %v952 = vpack.c.b16 %v943, %v942
          %v953 = vpack.c.b16 %v945, %v944
          %962 = vmatprep.subr.bf16.mxu0 0
          %963 = vmatpush1.bf16.msra.mxu0 %v953
          %964 = vmatprep.subr.bf16.mxu0 0
          %965 = vmatpush1.bf16.msra.mxu0 %v952
          %966 = vmatprep.subr.bf16.mxu0 0
          %967 = vmatpush1.bf16.msra.mxu0 %v951
          %968 = vmatprep.subr.bf16.mxu0 0
          %969 = vmatpush1.bf16.msra.mxu0 %v950
          %970 = vmatprep.subr.bf16.mxu0 0
          %971 = vmatpush1.bf16.msra.mxu0 %v949
          %972 = vmatprep.subr.bf16.mxu0 0
          %973 = vmatpush1.bf16.msra.mxu0 %v948
          %974 = vmatprep.subr.bf16.mxu0 0
          %975 = vmatpush1.bf16.msra.mxu0 %v947
          %976 = vmatprep.subr.bf16.mxu0 0
          %977 = vmatpush1.bf16.msra.mxu0 %v946
          %978 = vmatprep.subr.bf16.mxu0 0
          %979 = vmatpush2.bf16.msra.mxu0 0
          %980 = vmatprep.subr.bf16.mxu0 0
          %981 = vmatpush2.bf16.msra.mxu0 0
          %982 = vmatprep.subr.bf16.mxu0 0
          %983 = vmatpush2.bf16.msra.mxu0 0
          %984 = vmatprep.subr.bf16.mxu0 0
          %985 = vmatpush2.bf16.msra.mxu0 0
          %986 = vmatprep.subr.bf16.mxu0 0
          %987 = vmatpush2.bf16.msra.mxu0 0
          %988 = vmatprep.subr.bf16.mxu0 0
          %989 = vmatpush2.bf16.msra.mxu0 0
          %990 = vmatprep.subr.bf16.mxu0 0
          %991 = vmatpush2.bf16.msra.mxu0 0
          %992 = vmatprep.subr.bf16.mxu0 0
          %993 = vmatpush2.bf16.msra.mxu0 0
          %994 = vmatprep.mubr.bf16.mxu0 0
          %995 = vmatmul.mubr.bf16.gmra.mxu0 %v897
          %v996 = vpop.f32.mrf.mxu0
          %v997 = vadd.f32 0.0, %v996
          %v998 = vpop.f32.mrf.mxu0
          %v999 = vpop.f32.mrf.mxu0
          %v1000 = vpop.f32.mrf.mxu0
          %1001 = vdwg.mxu0
          %v1002 = vadd.f32 %v896, %v997
          %1003 = vst [vmem:[#allocation9] sm:$0xff] %v1002
        $region68: #{transformer_classifier_forward.1} parent=59 // pred_fallthru
          _
        %p1004 = scmp.ge.s32.totalorder %s35, 2
        // Predicated region
        $region69: #{transformer_classifier_forward.1} parent=59 // pred_check
          %p1005 = pneg %p1004
        $region70: #{transformer_classifier_forward.1} parent=59 // pred_check_branch
          %1007 = sbr.rel (%p1005) target = $region72
        $region71: #{transformer_classifier_forward.1} parent=59 // pred_region
          %v1008 = vld [vmem:[%s724] sm:$0xff]
          %1009 = vst [vmem:[%s686] sm:$0xff] %v1008
          %v1010 = vld [vmem:[%s734] sm:$0xff]
          %1011 = vst [vmem:[%s693] sm:$0xff] %v1010
        $region72: #{transformer_classifier_forward.1} parent=59 // pred_fallthru
          _
        %s1012 = sand.u32 %s347, 1
        %s1013 = scalar_lea.sflag [#allocation3], %s1012
        %s1014 = sand.u32 %s347, 1
        %s1015 = smul.addr %s1014, 8
        %s1016 = scalar_lea.vmem [#allocation2], %s1015
        %s1017 = sand.u32 %s35, 1
        %s1018 = scalar_lea.sflag [#allocation5], %s1017
        %s1019 = sand.u32 %s373, 1
        %s1020 = smul.addr %s1019, 8
        %s1021 = scalar_lea.vmem [#allocation4], %s1020
        %s1022 = sand.u32 %s35, 1
        %s1023 = scalar_lea.sflag [#allocation5], %s1022
        %s1024 = sand.u32 %s403, 1
        %s1025 = smul.addr %s1024, 8
        %s1026 = scalar_lea.vmem [#allocation6], %s1025
        %s1027 = sand.u32 %s35, 1
        %s1028 = scalar_lea.sflag [#allocation8], %s1027
        %s1029 = sand.u32 %s433, 1
        %s1030 = smul.addr %s1029, 8
        %s1031 = scalar_lea.vmem [#allocation7], %s1030
        // Predicated region
        $region73: #{transformer_classifier_forward.1} parent=59 // pred_check
          %p1032 = pneg %p357
        $region74: #{transformer_classifier_forward.1} parent=59 // pred_check_branch
          %1034 = sbr.rel (%p1032) target = $region76
        $region75: #{transformer_classifier_forward.1} parent=59 // pred_region
          %s1036 = ssub.s32 128, 128
          %1037 = vsyncadd %s1013, %s1036
          %s1038 = smul.addr %s35, 128
          %s1039 = scalar_lea.hbm %s10, %s1038
          %s1041 = sshll.u32 %s1016, 4
          %s1042 = int_to_ptr.vmem [resolvable:$true] %s1041
          %1044 = dma.vmem_to_hbm [thread:$0]  %s1042, 128, %s1039, %s1013
        $region76: #{transformer_classifier_forward.1} parent=59 // pred_fallthru
          _
        // Predicated region
        $region77: #{transformer_classifier_forward.1} parent=59 // pred_check
          %p1045 = pneg %p383
        $region78: #{transformer_classifier_forward.1} parent=59 // pred_check_branch
          %1047 = sbr.rel (%p1045) target = $region80
        $region79: #{transformer_classifier_forward.1} parent=59 // pred_region
          %s1049 = ssub.s32 128, 128
          %1050 = vsyncadd %s1018, %s1049
          %s1051 = smul.addr %s35, 128
          %s1052 = scalar_lea.hbm %s11, %s1051
          %s1054 = sshll.u32 %s1021, 4
          %s1055 = int_to_ptr.vmem [resolvable:$true] %s1054
          %1057 = dma.vmem_to_hbm [thread:$0]  %s1055, 128, %s1052, %s1018
        $region80: #{transformer_classifier_forward.1} parent=59 // pred_fallthru
          _
        // Predicated region
        $region81: #{transformer_classifier_forward.1} parent=59 // pred_check
          %p1058 = pneg %p413
        $region82: #{transformer_classifier_forward.1} parent=59 // pred_check_branch
          %1060 = sbr.rel (%p1058) target = $region84
        $region83: #{transformer_classifier_forward.1} parent=59 // pred_region
          %p1061 = scmp.lt.s32.totalorder %s35, 1
          %s1062 = scalar_select %p1061, %s35, 1
          %s1064 = ssub.s32 128, 128
          %1065 = vsyncadd %s1023, %s1064
          %s1066 = smul.addr %s1062, 128
          %s1067 = scalar_lea.hbm %s12, %s1066
          %s1069 = sshll.u32 %s1026, 4
          %s1070 = int_to_ptr.vmem [resolvable:$true] %s1069
          %1072 = dma.vmem_to_hbm [thread:$0]  %s1070, 128, %s1067, %s1023
        $region84: #{transformer_classifier_forward.1} parent=59 // pred_fallthru
          _
        // Predicated region
        $region85: #{transformer_classifier_forward.1} parent=59 // pred_check
          %p1073 = pneg %p443
        $region86: #{transformer_classifier_forward.1} parent=59 // pred_check_branch
          %1075 = sbr.rel (%p1073) target = $region88
        $region87: #{transformer_classifier_forward.1} parent=59 // pred_region
          %p1076 = scmp.lt.s32.totalorder %s35, 1
          %s1077 = scalar_select %p1076, %s35, 1
          %s1079 = ssub.s32 128, 128
          %1080 = vsyncadd %s1028, %s1079
          %s1081 = smul.addr %s1077, 128
          %s1082 = scalar_lea.hbm %s13, %s1081
          %s1084 = sshll.u32 %s1031, 4
          %s1085 = int_to_ptr.vmem [resolvable:$true] %s1084
          %1087 = dma.vmem_to_hbm [thread:$0]  %s1085, 128, %s1082, %s1028
        $region88: #{transformer_classifier_forward.1} parent=59 // pred_fallthru
          _
        // Predicated region
        $region89: #{transformer_classifier_forward.1} parent=59 // pred_check
          %p1088 = pneg %p464
        $region90: #{transformer_classifier_forward.1} parent=59 // pred_check_branch
          %1090 = sbr.rel (%p1088) target = $region92
        $region91: #{transformer_classifier_forward.1} parent=59 // pred_region
          %s1092 = ssub.s32 128, 128
          %1093 = vsyncadd [#allocation8], %s1092
          %s1095 = sshll.u32 [#allocation9], 4
          %s1096 = int_to_ptr.vmem [resolvable:$true] %s1095
          %1098 = dma.vmem_to_hbm [thread:$0]  %s1096, 128, %s14, [#allocation8]
        $region92: #{transformer_classifier_forward.1} parent=59 // pred_fallthru
          _
        // Predicated region
        $region93: #{transformer_classifier_forward.1} parent=59 // pred_check
          %p1099 = pneg %p464
        $region94: #{transformer_classifier_forward.1} parent=59 // pred_check_branch
          %1101 = sbr.rel (%p1099) target = $region96
        $region95: #{transformer_classifier_forward.1} parent=59 // pred_region
          %1102 = dma.done [#allocation8], 128
        $region96: #{transformer_classifier_forward.1} parent=59 // pred_fallthru
          _
      $region60: #{transformer_classifier_forward.1} parent=5 // pred_fallthru
        _
      %p1103 = scmp.le.s32.totalorder 2, %s30
      // Predicated region
      $region97: #{transformer_classifier_forward.1} parent=5 // pred_check
        %p1104 = pneg %p1103
      $region98: #{transformer_classifier_forward.1} parent=5 // pred_check_branch
        %1106 = sbr.rel (%p1104) target = $region100
      $region99: #{transformer_classifier_forward.1} parent=5 // pred_region
        %s1107 = ssub.s32 %s30, 2
        // Predicated region
        $region101: #{transformer_classifier_forward.1} parent=99 // pred_check
          %p1108 = pneg %p363
        $region102: #{transformer_classifier_forward.1} parent=99 // pred_check_branch
          %1110 = sbr.rel (%p1108) target = $region104
        $region103: #{transformer_classifier_forward.1} parent=99 // pred_region
          %s1111 = sand.u32 %s348, 1
          %s1112 = scalar_lea.sflag [#allocation3], %s1111
          %s1113 = sand.u32 %s348, 1
          %s1114 = smul.addr %s1113, 8
          %s1115 = scalar_lea.vmem [#allocation2], %s1114
          %1116 = dma.done %s1112, 128
        $region104: #{transformer_classifier_forward.1} parent=99 // pred_fallthru
          _
        // Predicated region
        $region105: #{transformer_classifier_forward.1} parent=99 // pred_check
          %p1117 = pneg %p389
        $region106: #{transformer_classifier_forward.1} parent=99 // pred_check_branch
          %1119 = sbr.rel (%p1117) target = $region108
        $region107: #{transformer_classifier_forward.1} parent=99 // pred_region
          %s1120 = sand.u32 %s36, 1
          %s1121 = scalar_lea.sflag [#allocation5], %s1120
          %s1122 = sand.u32 %s374, 1
          %s1123 = smul.addr %s1122, 8
          %s1124 = scalar_lea.vmem [#allocation4], %s1123
          %1125 = dma.done %s1121, 128
        $region108: #{transformer_classifier_forward.1} parent=99 // pred_fallthru
          _
        // Predicated region
        $region109: #{transformer_classifier_forward.1} parent=99 // pred_check
          %p1126 = pneg %p419
        $region110: #{transformer_classifier_forward.1} parent=99 // pred_check_branch
          %1128 = sbr.rel (%p1126) target = $region112
        $region111: #{transformer_classifier_forward.1} parent=99 // pred_region
          %s1129 = sand.u32 %s36, 1
          %s1130 = scalar_lea.sflag [#allocation5], %s1129
          %s1131 = sand.u32 %s404, 1
          %s1132 = smul.addr %s1131, 8
          %s1133 = scalar_lea.vmem [#allocation6], %s1132
          %1134 = dma.done %s1130, 128
        $region112: #{transformer_classifier_forward.1} parent=99 // pred_fallthru
          _
        // Predicated region
        $region113: #{transformer_classifier_forward.1} parent=99 // pred_check
          %p1135 = pneg %p449
        $region114: #{transformer_classifier_forward.1} parent=99 // pred_check_branch
          %1137 = sbr.rel (%p1135) target = $region116
        $region115: #{transformer_classifier_forward.1} parent=99 // pred_region
          %s1138 = sand.u32 %s36, 1
          %s1139 = scalar_lea.sflag [#allocation8], %s1138
          %s1140 = sand.u32 %s434, 1
          %s1141 = smul.addr %s1140, 8
          %s1142 = scalar_lea.vmem [#allocation7], %s1141
          %1143 = dma.done %s1139, 128
        $region116: #{transformer_classifier_forward.1} parent=99 // pred_fallthru
          _
      $region100: #{transformer_classifier_forward.1} parent=5 // pred_fallthru
        _
    $region6: #{transformer_classifier_forward.1} parent=1 // loop_footer
      %s34 = sadd.s32 1, %s30
    $region7: #{transformer_classifier_forward.1} parent=1 // loop_footer_branch
      %29 = sbr.rel target = $region3
    $region8: #{transformer_classifier_forward.1} parent=1 // loop_exit
      _
    %1144 = vsyncpa [#allocation3], 1
    %s1145 = scalar_lea.sflag [#allocation3], 1
    %1146 = vsyncpa %s1145, 1
    %1147 = vsyncpa [#allocation5], 1
    %s1148 = scalar_lea.sflag [#allocation5], 1
    %1149 = vsyncpa %s1148, 1
    %1150 = vsyncpa [#allocation8], 1
    %s1151 = scalar_lea.sflag [#allocation8], 1
    %1152 = vsyncpa %s1151, 1

</llo_original>
